<compile_context>
chip_gen: v6e
topology: v6e:2x2x1
jax: 0.10.0
libtpu: 0.0.40
codegen_flags: <defaults>
</compile_context>

<pallas_src>
import math

import numpy as np
import jax
import jax.numpy as jnp
from jax import lax
from jax.experimental import pallas as pl
from jax.experimental.pallas import tpu as pltpu

LANE = 128


def _make_kernel(R: int, Bpad: int, L: int, eps: float = 1e-12):
    """Fused kernel: one MXU matmul + the three L2 normalizations."""

    def kernel(b_ref, h_ref, w_ref, o_ref):
        H = h_ref[...]                                        # (R, Bpad) f32
        W = w_ref[...]                                        # (Bpad, 256) f32

        # 1/max(||x||, eps): center columns of the slab are exactly the packed
        # (zero-padded) x, so the padded tail contributes 0 to the sum.
        xc = H[:, 0:LANE]
        sumsq = jnp.sum(xc * xc, keepdims=True)               # (1, 1)
        inv_norm = lax.rsqrt(jnp.maximum(sumsq, eps * eps))

        # Both branches' banded convolutions (rolls + shared avg-pool + folded
        # Linear + boundary handling) in a single MXU matmul.
        base = jnp.dot(H, W, preferred_element_type=jnp.float32)   # (R, 256)

        # Valid-position mask: exclude the zero-padded tail from the output norms.
        r_i = lax.broadcasted_iota(jnp.int32, (R, LANE), 0)
        c_i = lax.broadcasted_iota(jnp.int32, (R, LANE), 1)
        valid = (r_i * LANE + c_i) < L

        def finish(pre, bias):
            pooled = inv_norm * pre + bias                    # (R, 128)
            pv = jnp.where(valid, pooled, 0.0)
            psq = jnp.sum(pv * pv, keepdims=True)
            return pooled * lax.rsqrt(jnp.maximum(psq, eps * eps))

        o1 = finish(base[:, 0:LANE], b_ref[0])
        o2 = finish(base[:, LANE:2 * LANE], b_ref[1])
        o_ref[...] = (o1 + o2).astype(o_ref.dtype)

    return kernel


def predict_net_forward(x_ncl, w1, b1, w2, b2, k1, k2, eps=1e-12):
    """x_ncl: (1, 1, L) float32. w*: (3, k*+1), b*: (3,). Returns (1, 1, L)."""
    assert x_ncl.shape[0] == 1 and x_ncl.shape[1] == 1, "forward requires batch == 1"
    assert k1 % 2 == 1 and k2 % 2 == 1, "odd kernel sizes required for 'same' pooling"
    L = int(x_ncl.shape[-1])
    kmax = max(k1, k2)
    p = k1 // 2                       # avgpool1 is used for BOTH branches (quirk)
    assert L >= kmax and kmax <= LANE

    left, right = kmax - 1, p         # halo widths (circular rolls / avg-pool reach)
    R = -(-L // LANE)
    Lp = R * LANE
    B = LANE + left + right           # slab width: center | left halo | right halo
    Btot = B + 1                      # + row-0 indicator column
    Bpad = -(-Btot // LANE) * LANE    # lane-align the contraction dim (MXU safety)

    x = x_ncl.reshape(L).astype(jnp.float32)

    # ---------- host side: weight folding + layout plumbing (O(L) + O(k)) ----------
    # Linear(k+1 -> 3) + flatten + AvgPool1d(3, 3)  ==  mean over the 3 outputs.
    w1e = jnp.mean(w1.astype(jnp.float32), axis=0)            # (k1+1,)
    w2e = jnp.mean(w2.astype(jnp.float32), axis=0)            # (k2+1,)
    wa1 = w1e[k1] / float(k1)                                 # avg-row weight / k1
    wa2 = w2e[k2] / float(k1)                                 # both use avgpool1 (quirk)
    b_eff = jnp.stack([jnp.mean(b1), jnp.mean(b2)]).astype(jnp.float32)

    # Combined circular weights c_b[s] over shifts s in [-p, kmax-1]:
    # roll taps (s in [0, k_b-1]) + the shared avg-pool taps (s in [-p, p]).
    s_vals = np.arange(-p, kmax)

    def combined(we, kb, wa):
        roll_w = jnp.where((s_vals >= 0) & (s_vals < kb),
                           we[np.clip(s_vals, 0, kb - 1)], 0.0)
        avg_w = jnp.where(np.abs(s_vals) <= p, wa, 0.0)
        return roll_w + avg_w                                  # (kmax + p,)

    c1 = combined(w1e, k1, wa1)
    c2 = combined(w2e, k2, wa2)

    # Banded weight matrix.  Slab column m holds x_ext[row*128 + offs[m]], so
    # W_band[m, c] = c_b[c - offs[m]] wherever that shift is in support.
    offs = np.concatenate([np.arange(LANE),                    # center
                           np.arange(-left, 0),                # left halo
                           np.arange(LANE, LANE + right)])     # right halo
    s_mat = np.arange(LANE)[None, :] - offs[:, None]           # (B, 128)
    in_sup = (s_mat >= -p) & (s_mat <= kmax - 1)
    s_idx = np.clip(s_mat + p, 0, kmax + p - 1)

    def band(cb):
        return jnp.where(in_sup, cb[s_idx], 0.0)               # (B, 128)

    W = jnp.zeros((Bpad, 2 * LANE), jnp.float32)
    W = W.at[:B, :LANE].set(band(c1))
    W = W.at[:B, LANE:].set(band(c2))
    if p > 0:
        # Row-0 avg-pool wrap correction (avg-pool wants zero padding, the slab's
        # left halo is circular for the roll taps):  T[j] = sum_{t=1..p-j} x[L-t].
        tail = x[L - p:]
        T = jnp.cumsum(tail[::-1])[::-1]                       # (p,)
        W = W.at[B, :p].set(-wa1 * T)
        W = W.at[B, LANE:LANE + p].set(-wa2 * T)

    # Halo slab H[r, m] = x_ext[r*128 + offs[m]] with circular left wrap (wrt the
    # true L) and zero right/tail padding, plus the row-0 indicator column.
    wrap = x[L - left:] if left > 0 else jnp.zeros((0,), jnp.float32)
    x_ext = jnp.concatenate([wrap, x, jnp.zeros((Lp - L + right,), jnp.float32)])
    gidx = left + (np.arange(R) * LANE)[:, None] + offs[None, :]    # (R, B)
    Hm = x_ext[gidx]
    ind = jnp.asarray((np.arange(R) == 0)[:, None], jnp.float32)    # (R, 1)
    Hpad = jnp.zeros((R, Bpad - Btot), jnp.float32)
    H = jnp.concatenate([Hm, ind, Hpad], axis=1)                    # (R, Bpad)

    # ---------- the fused kernel ----------
    kernel = _make_kernel(R, Bpad, L, eps)
    smem = pl.BlockSpec(memory_space=pltpu.MemorySpace.SMEM)
    vmem = pl.BlockSpec(memory_space=pltpu.MemorySpace.VMEM)
    out = pl.pallas_call(
        kernel,
        out_shape=jax.ShapeDtypeStruct((R, LANE), jnp.float32),
        in_specs=[smem, vmem, vmem],
        out_specs=vmem,
    )(b_eff, H, W)
    return out.reshape(Lp)[:L].reshape(1, 1, L)


def _reference(x_ncl, w1, b1, w2, b2, k1, k2, eps=1e-12):
    """Pure-JAX mirror of the original PyTorch forward (unfused)."""
    L = x_ncl.shape[-1]
    x = x_ncl.reshape(1, L).astype(jnp.float32)
    xn = x / jnp.maximum(jnp.linalg.norm(x, axis=1, keepdims=True), eps)

    def avgpool_same(v, k):
        p = k // 2
        vp = jnp.pad(v, ((0, 0), (p, p)))
        return jnp.stack([vp[:, d:d + L] for d in range(k)], 0).sum(0) / k

    def branch(k, w, b, avg_row):
        rows = [jnp.roll(xn, i, axis=1) for i in range(k)]
        feat = jnp.concatenate(rows + [avg_row], axis=0)        # (k+1, L)
        pre = w @ feat + b[:, None]                             # (3, L)
        pooled = pre.mean(axis=0, keepdims=True)                # (1, L)
        return pooled / jnp.maximum(
            jnp.linalg.norm(pooled, axis=1, keepdims=True), eps)

    avg1 = avgpool_same(xn, k1)                                 # avgpool1 for both
    return (branch(k1, w1, b1, avg1) + branch(k2, w2, b2, avg1)).reshape(1, 1, L)


if __name__ == "__main__":
    kernel_size1, kernel_size2, pred_len = 5, 3, 3

    key = jax.random.PRNGKey(0)
    kx1, kx2, kw1, kb1, kw2, kb2 = jax.random.split(key, 6)

    # nn.Linear default init: U(-1/sqrt(fan_in), 1/sqrt(fan_in))
    def linear_params(kw, kb, fan_in, fan_out):
        bound = 1.0 / math.sqrt(fan_in)
        w = jax.random.uniform(kw, (fan_out, fan_in), jnp.float32, -bound, bound)
        b = jax.random.uniform(kb, (fan_out,), jnp.float32, -bound, bound)
        return w, b

    w1, b1 = linear_params(kw1, kb1, kernel_size1 + 1, pred_len)
    w2, b2 = linear_params(kw2, kb2, kernel_size2 + 1, pred_len)

    # One lane-aligned and one ragged length (exercises padding / masking / wrap).
    for kx, data_length in ((kx1, 128), (kx2, 200)):
        x = jax.random.normal(kx, (1, 1, data_length), dtype=jnp.float32)
        out = predict_net_forward(x, w1, b1, w2, b2, kernel_size1, kernel_size2)
        out = jax.block_until_ready(out)
        ref = _reference(x, w1, b1, w2, b2, kernel_size1, kernel_size2)
        assert out.shape == (1, 1, data_length)
        max_err = float(jnp.max(jnp.abs(out - ref)))
        assert max_err < 1e-4, f"L={data_length}: max abs err {max_err}"

    print("KERNEL_OK")
</pallas_src>

<mosaic_0001>
module attributes {stable_mosaic.version = 11 : i64} {
  func.func @kernel(%arg0: memref<2xf32, #tpu.memory_space<smem>>, %arg1: memref<1x256xf32, #tpu.memory_space<vmem>>, %arg2: memref<256x256xf32, #tpu.memory_space<vmem>>, %arg3: memref<1x128xf32, #tpu.memory_space<vmem>>) attributes {dimension_semantics = [], scalar_prefetch = 0 : i64, scratch_operands = 0 : i64, tpu.core_type = #tpu.core_type<tc>} {
    %c0 = arith.constant 0 : index
    %c0_0 = arith.constant 0 : index
    %0 = vector.load %arg1[%c0, %c0_0] : memref<1x256xf32, #tpu.memory_space<vmem>>, vector<1x256xf32>
    %c0_1 = arith.constant 0 : index
    %c0_2 = arith.constant 0 : index
    %1 = vector.load %arg2[%c0_1, %c0_2] : memref<256x256xf32, #tpu.memory_space<vmem>>, vector<256x256xf32>
    %2 = vector.extract_strided_slice %0 {offsets = [0, 0], sizes = [1, 128], strides = [1, 1]} : vector<1x256xf32> to vector<1x128xf32>
    %3 = arith.mulf %2, %2 : vector<1x128xf32>
    %4 = vector.shape_cast %3 : vector<1x128xf32> to vector<1x1x128xf32>
    %cst = arith.constant dense<0.000000e+00> : vector<1xf32>
    %5 = vector.multi_reduction <add>, %4, %cst [1, 2] : vector<1x1x128xf32> to vector<1xf32>
    %6 = vector.shape_cast %5 : vector<1xf32> to vector<1x1x1xf32>
    %7 = vector.extract %6[0, 0, 0] : f32 from vector<1x1x1xf32>
    %8 = vector.broadcast %7 : f32 to vector<1x1xf32>
    %cst_3 = arith.constant 1.000000e-24 : f32
    %9 = vector.broadcast %cst_3 : f32 to vector<1x1xf32>
    %10 = arith.maximumf %8, %9 : vector<1x1xf32>
    %11 = math.rsqrt %10 : vector<1x1xf32>
    %cst_4 = arith.constant dense<0.000000e+00> : vector<1x256xf32>
    %12 = tpu.matmul %0, %1, %cst_4 {dimension_numbers = #tpu.dot_dimension_numbers<[1], [0], [0], [1], [0, 0, 1, 1], [], []>} : vector<1x256xf32>, vector<256x256xf32>, vector<1x256xf32> -> vector<1x256xf32>
    %13 = tpu.iota {dimensions = array<i32: 0>} : vector<1x128xi32>
    %14 = tpu.iota {dimensions = array<i32: 1>} : vector<1x128xi32>
    %c128_i32 = arith.constant 128 : i32
    %15 = vector.broadcast %c128_i32 : i32 to vector<1x128xi32>
    %16 = arith.muli %13, %15 : vector<1x128xi32>
    %17 = arith.addi %16, %14 : vector<1x128xi32>
    %c128_i32_5 = arith.constant 128 : i32
    %18 = vector.broadcast %c128_i32_5 : i32 to vector<1x128xi32>
    %19 = arith.cmpi slt, %17, %18 : vector<1x128xi32>
    %20 = vector.extract_strided_slice %12 {offsets = [0, 0], sizes = [1, 128], strides = [1, 1]} : vector<1x256xf32> to vector<1x128xf32>
    %c0_6 = arith.constant 0 : index
    %21 = memref.load %arg0[%c0_6] : memref<2xf32, #tpu.memory_space<smem>>
    %22 = vector.broadcast %11 : vector<1x1xf32> to vector<1x128xf32>
    %23 = arith.mulf %22, %20 : vector<1x128xf32>
    %24 = vector.broadcast %21 : f32 to vector<1x128xf32>
    %25 = arith.addf %23, %24 : vector<1x128xf32>
    %cst_7 = arith.constant 0.000000e+00 : f32
    %26 = vector.broadcast %cst_7 : f32 to vector<1x128xf32>
    %27 = arith.select %19, %25, %26 : vector<1x128xi1>, vector<1x128xf32>
    %28 = arith.mulf %27, %27 : vector<1x128xf32>
    %29 = vector.shape_cast %28 : vector<1x128xf32> to vector<1x1x128xf32>
    %cst_8 = arith.constant dense<0.000000e+00> : vector<1xf32>
    %30 = vector.multi_reduction <add>, %29, %cst_8 [1, 2] : vector<1x1x128xf32> to vector<1xf32>
    %31 = vector.shape_cast %30 : vector<1xf32> to vector<1x1x1xf32>
    %32 = vector.extract %31[0, 0, 0] : f32 from vector<1x1x1xf32>
    %33 = vector.broadcast %32 : f32 to vector<1x1xf32>
    %cst_9 = arith.constant 1.000000e-24 : f32
    %34 = vector.broadcast %cst_9 : f32 to vector<1x1xf32>
    %35 = arith.maximumf %33, %34 : vector<1x1xf32>
    %36 = math.rsqrt %35 : vector<1x1xf32>
    %37 = vector.broadcast %36 : vector<1x1xf32> to vector<1x128xf32>
    %38 = arith.mulf %25, %37 : vector<1x128xf32>
    %39 = vector.extract_strided_slice %12 {offsets = [0, 128], sizes = [1, 128], strides = [1, 1]} : vector<1x256xf32> to vector<1x128xf32>
    %c1 = arith.constant 1 : index
    %40 = memref.load %arg0[%c1] : memref<2xf32, #tpu.memory_space<smem>>
    %41 = vector.broadcast %11 : vector<1x1xf32> to vector<1x128xf32>
    %42 = arith.mulf %41, %39 : vector<1x128xf32>
    %43 = vector.broadcast %40 : f32 to vector<1x128xf32>
    %44 = arith.addf %42, %43 : vector<1x128xf32>
    %cst_10 = arith.constant 0.000000e+00 : f32
    %45 = vector.broadcast %cst_10 : f32 to vector<1x128xf32>
    %46 = arith.select %19, %44, %45 : vector<1x128xi1>, vector<1x128xf32>
    %47 = arith.mulf %46, %46 : vector<1x128xf32>
    %48 = vector.shape_cast %47 : vector<1x128xf32> to vector<1x1x128xf32>
    %cst_11 = arith.constant dense<0.000000e+00> : vector<1xf32>
    %49 = vector.multi_reduction <add>, %48, %cst_11 [1, 2] : vector<1x1x128xf32> to vector<1xf32>
    %50 = vector.shape_cast %49 : vector<1xf32> to vector<1x1x1xf32>
    %51 = vector.extract %50[0, 0, 0] : f32 from vector<1x1x1xf32>
    %52 = vector.broadcast %51 : f32 to vector<1x1xf32>
    %cst_12 = arith.constant 1.000000e-24 : f32
    %53 = vector.broadcast %cst_12 : f32 to vector<1x1xf32>
    %54 = arith.maximumf %52, %53 : vector<1x1xf32>
    %55 = math.rsqrt %54 : vector<1x1xf32>
    %56 = vector.broadcast %55 : vector<1x1xf32> to vector<1x128xf32>
    %57 = arith.mulf %44, %56 : vector<1x128xf32>
    %58 = arith.addf %38, %57 : vector<1x128xf32>
    %c0_13 = arith.constant 0 : index
    %c0_14 = arith.constant 0 : index
    %59 = vector.load %arg3[%c0_13, %c0_14] : memref<1x128xf32, #tpu.memory_space<vmem>>, vector<1x128xf32>
    tpu.vector_store %arg3[%c0_13, %c0_14], %58 {strides = array<i32>} : memref<1x128xf32, #tpu.memory_space<vmem>>, vector<1x128xf32>,
    return
  }
}

</mosaic_0001>

<llo_original>
// kernel: tpu_custom_call.1
$region0: #{tpu_custom_call.1}
  #allocation0 [shape = 'u32[]', space=smem, size = 0x4, offset = 0x4, fixed_abs, tag = 'smem constant byte address 0x4 - core index']
  #allocation1 [shape = 'u32[144,128]{1,0:T(1,128)}', space=vmem, size = 0x12000, scoped, tag = 'internal scratch']
  %s0 = inlined_call_operand.hbm [shape: f32[2], index: 0, kind: input, shape index: {}]
  %s1 = inlined_call_operand.hbm [shape: f32[1,256], index: 1, kind: input, shape index: {}]
  %s2 = inlined_call_operand.hbm [shape: f32[256,256], index: 2, kind: input, shape index: {}]
  %s3 = inlined_call_operand.hbm [shape: f32[1,128], index: 3, kind: output, shape index: {}]
  %s4 = sld [smem:[#allocation0]]
  $region34: #{tpu_custom_call.1} parent=0
    _
  %s6 = ssub.s32 1, %s4
  %s7 = scalar_select 0, %s6, %s4
  $region1: #{tpu_custom_call.1} parent=0
    #allocation2 [shape = 'u8[512]{0}', space=smem, size = 0x200, scoped, tag = 'input window, operand 0, single buffered']
    #allocation3 [shape = 's32[1]{0}', space=sflag, size = 0x4, scoped, tag = 'scoped memory for tpu_custom_call.1']
    #allocation4 [shape = 's32[1]{0}', space=sflag, size = 0x4, scoped, tag = 'scoped memory for tpu_custom_call.1']
    #allocation5 [shape = 's32[1]{0}', space=sflag, size = 0x4, scoped, tag = 'scoped memory for tpu_custom_call.1']
    #allocation6 [shape = 'u8[1024]{0}', space=vmem, size = 0x400, scoped, tag = 'input window, operand 1, single buffered']
    #allocation7 [shape = 'u8[262144]{0}', space=vmem, size = 0x40000, scoped, tag = 'input window, operand 2, single buffered']
    #allocation8 [shape = 's32[1]{0}', space=sflag, size = 0x4, scoped, tag = 'scoped memory for tpu_custom_call.1']
    #allocation9 [shape = 'u8[512]{0}', space=vmem, size = 0x400, scoped, tag = 'output window, operand 0, single buffered']
    %8 = vsyncpa [#allocation5], 0
    %9 = vsyncpa [#allocation3], 0
    %10 = vsyncpa [#allocation8], 0
    %11 = vsyncpa [#allocation4], 0
    // Predicated region
    $region2: #{tpu_custom_call.1} parent=1 // pred_check
      _
    $region3: #{tpu_custom_call.1} parent=1 // pred_check_branch
      %13 = sbr.rel (0) target = $region5
    $region4: #{tpu_custom_call.1} parent=1 // pred_region
      %s15 = ssub.s32 16, 16
      %16 = vsyncadd [#allocation5], %s15
      %19 = dma.hbm_to_smem %s0, 16, [#allocation2], [#allocation5]
    $region5: #{tpu_custom_call.1} parent=1 // pred_fallthru
      _
    // Predicated region
    $region6: #{tpu_custom_call.1} parent=1 // pred_check
      _
    $region7: #{tpu_custom_call.1} parent=1 // pred_check_branch
      %21 = sbr.rel (0) target = $region9
    $region8: #{tpu_custom_call.1} parent=1 // pred_region
      %s23 = ssub.s32 32, 32
      %24 = vsyncadd [#allocation3], %s23
      %s26 = sshll.u32 [#allocation6], 4
      %s27 = int_to_ptr.vmem [resolvable:$true] %s26
      %29 = dma.hbm_to_vmem [thread:$0]  %s1, 32, %s27, [#allocation3]
    $region9: #{tpu_custom_call.1} parent=1 // pred_fallthru
      _
    // Predicated region
    $region10: #{tpu_custom_call.1} parent=1 // pred_check
      _
    $region11: #{tpu_custom_call.1} parent=1 // pred_check_branch
      %31 = sbr.rel (0) target = $region13
    $region12: #{tpu_custom_call.1} parent=1 // pred_region
      %s33 = ssub.s32 8192, 8192
      %34 = vsyncadd [#allocation8], %s33
      %s35 = sshll.u32 [#allocation7], 4
      %s36 = int_to_ptr.vmem [resolvable:$true] %s35
      %41 = dma.hbm_to_vmem [thread:$0]  %s2, 8192, %s36, [#allocation8], 256, 256, 16
    $region13: #{tpu_custom_call.1} parent=1 // pred_fallthru
      _
    // Predicated region
    $region14: #{tpu_custom_call.1} parent=1 // pred_check
      _
    $region15: #{tpu_custom_call.1} parent=1 // pred_check_branch
      %43 = sbr.rel (0) target = $region17
    $region16: #{tpu_custom_call.1} parent=1 // pred_region
      %44 = dma.done [#allocation5], 16
    $region17: #{tpu_custom_call.1} parent=1 // pred_fallthru
      _
    // Predicated region
    $region18: #{tpu_custom_call.1} parent=1 // pred_check
      _
    $region19: #{tpu_custom_call.1} parent=1 // pred_check_branch
      %46 = sbr.rel (0) target = $region21
    $region20: #{tpu_custom_call.1} parent=1 // pred_region
      %47 = dma.done [#allocation3], 32
    $region21: #{tpu_custom_call.1} parent=1 // pred_fallthru
      _
    // Predicated region
    $region22: #{tpu_custom_call.1} parent=1 // pred_check
      _
    $region23: #{tpu_custom_call.1} parent=1 // pred_check_branch
      %49 = sbr.rel (0) target = $region25
    $region24: #{tpu_custom_call.1} parent=1 // pred_region
      %50 = dma.done [#allocation8], 8192
    $region25: #{tpu_custom_call.1} parent=1 // pred_fallthru
      _
    %51 = sfence
    %v52 = vld [vmem:[#allocation6] sm:$0x3]
    %v53 = vld [vmem:[#allocation7] sm:$0xff]
    %v54 = vld [vmem:[#allocation7 + $0x8] sm:$0xff]
    %v55 = vld [vmem:[#allocation7 + $0x10] sm:$0xff]
    %v56 = vld [vmem:[#allocation7 + $0x18] sm:$0xff]
    %v57 = vld [vmem:[#allocation7 + $0x20] sm:$0xff]
    %v58 = vld [vmem:[#allocation7 + $0x28] sm:$0xff]
    %v59 = vld [vmem:[#allocation7 + $0x30] sm:$0xff]
    %v60 = vld [vmem:[#allocation7 + $0x38] sm:$0xff]
    %v61 = vld [vmem:[#allocation7 + $0x40] sm:$0xff]
    %v62 = vld [vmem:[#allocation7 + $0x48] sm:$0xff]
    %v63 = vld [vmem:[#allocation7 + $0x50] sm:$0xff]
    %v64 = vld [vmem:[#allocation7 + $0x58] sm:$0xff]
    %v65 = vld [vmem:[#allocation7 + $0x60] sm:$0xff]
    %v66 = vld [vmem:[#allocation7 + $0x68] sm:$0xff]
    %v67 = vld [vmem:[#allocation7 + $0x70] sm:$0xff]
    %v68 = vld [vmem:[#allocation7 + $0x78] sm:$0xff]
    %v69 = vld [vmem:[#allocation7 + $0x80] sm:$0xff]
    %v70 = vld [vmem:[#allocation7 + $0x88] sm:$0xff]
    %v71 = vld [vmem:[#allocation7 + $0x90] sm:$0xff]
    %v72 = vld [vmem:[#allocation7 + $0x98] sm:$0xff]
    %v73 = vld [vmem:[#allocation7 + $0xa0] sm:$0xff]
    %v74 = vld [vmem:[#allocation7 + $0xa8] sm:$0xff]
    %v75 = vld [vmem:[#allocation7 + $0xb0] sm:$0xff]
    %v76 = vld [vmem:[#allocation7 + $0xb8] sm:$0xff]
    %v77 = vld [vmem:[#allocation7 + $0xc0] sm:$0xff]
    %v78 = vld [vmem:[#allocation7 + $0xc8] sm:$0xff]
    %v79 = vld [vmem:[#allocation7 + $0xd0] sm:$0xff]
    %v80 = vld [vmem:[#allocation7 + $0xd8] sm:$0xff]
    %v81 = vld [vmem:[#allocation7 + $0xe0] sm:$0xff]
    %v82 = vld [vmem:[#allocation7 + $0xe8] sm:$0xff]
    %v83 = vld [vmem:[#allocation7 + $0xf0] sm:$0xff]
    %v84 = vld [vmem:[#allocation7 + $0xf8] sm:$0xff]
    %v85 = vld [vmem:[#allocation7 + $0x100] sm:$0xff]
    %v86 = vld [vmem:[#allocation7 + $0x108] sm:$0xff]
    %v87 = vld [vmem:[#allocation7 + $0x110] sm:$0xff]
    %v88 = vld [vmem:[#allocation7 + $0x118] sm:$0xff]
    %v89 = vld [vmem:[#allocation7 + $0x120] sm:$0xff]
    %v90 = vld [vmem:[#allocation7 + $0x128] sm:$0xff]
    %v91 = vld [vmem:[#allocation7 + $0x130] sm:$0xff]
    %v92 = vld [vmem:[#allocation7 + $0x138] sm:$0xff]
    %v93 = vld [vmem:[#allocation7 + $0x140] sm:$0xff]
    %v94 = vld [vmem:[#allocation7 + $0x148] sm:$0xff]
    %v95 = vld [vmem:[#allocation7 + $0x150] sm:$0xff]
    %v96 = vld [vmem:[#allocation7 + $0x158] sm:$0xff]
    %v97 = vld [vmem:[#allocation7 + $0x160] sm:$0xff]
    %v98 = vld [vmem:[#allocation7 + $0x168] sm:$0xff]
    %v99 = vld [vmem:[#allocation7 + $0x170] sm:$0xff]
    %v100 = vld [vmem:[#allocation7 + $0x178] sm:$0xff]
    %v101 = vld [vmem:[#allocation7 + $0x180] sm:$0xff]
    %v102 = vld [vmem:[#allocation7 + $0x188] sm:$0xff]
    %v103 = vld [vmem:[#allocation7 + $0x190] sm:$0xff]
    %v104 = vld [vmem:[#allocation7 + $0x198] sm:$0xff]
    %v105 = vld [vmem:[#allocation7 + $0x1a0] sm:$0xff]
    %v106 = vld [vmem:[#allocation7 + $0x1a8] sm:$0xff]
    %v107 = vld [vmem:[#allocation7 + $0x1b0] sm:$0xff]
    %v108 = vld [vmem:[#allocation7 + $0x1b8] sm:$0xff]
    %v109 = vld [vmem:[#allocation7 + $0x1c0] sm:$0xff]
    %v110 = vld [vmem:[#allocation7 + $0x1c8] sm:$0xff]
    %v111 = vld [vmem:[#allocation7 + $0x1d0] sm:$0xff]
    %v112 = vld [vmem:[#allocation7 + $0x1d8] sm:$0xff]
    %v113 = vld [vmem:[#allocation7 + $0x1e0] sm:$0xff]
    %v114 = vld [vmem:[#allocation7 + $0x1e8] sm:$0xff]
    %v115 = vld [vmem:[#allocation7 + $0x1f0] sm:$0xff]
    %v116 = vld [vmem:[#allocation7 + $0x1f8] sm:$0xff]
    %v117 = vmul.f32 %v52, %v52
    %vm118 = vcmask 1040384
    %v119 = vsel %vm118, %v117, 0.0
    %120 = vadd.xlane.f32.xlu0 %v119
    %v121 = vpop.xlane.xlu0 %120
    %v122 = vrot.slane %v121, 4
    %v123 = vadd.f32 %v121, %v122
    %v124 = vrot.slane %v123, 2
    %v125 = vadd.f32 %v123, %v124
    %v126 = vrot.slane %v125, 1
    %v127 = vadd.f32 %v125, %v126
    %s128 = vtos %v127
    %v129 = vstv %s128
    %v130 = vmax.f32 %v129, 1e-24
    %v131 = vrsqrt.pop %v130
    %v133 = vlaneseq
    %v134 = vshrl.u32 %v133, 7
    %v135 = vsub.s32 0, %v134
    %v136 = vrot.slane %v52, %v135
    %v137 = vlaneseq
    %v138 = vshrl.u32 %v137, 7
    %v139 = vsub.s32 1, %v138
    %v140 = vrot.slane %v52, %v139
    %143 = vmatprep.subr.mxu0 %v84
    %144 = vmatpush1.msra.mxu0 %v83
    %145 = vmatprep.subr.mxu0 %v82
    %146 = vmatpush1.msra.mxu0 %v81
    %147 = vmatprep.subr.mxu0 %v80
    %148 = vmatpush1.msra.mxu0 %v79
    %149 = vmatprep.subr.mxu0 %v78
    %150 = vmatpush1.msra.mxu0 %v77
    %151 = vmatprep.subr.mxu0 %v76
    %152 = vmatpush1.msra.mxu0 %v75
    %153 = vmatprep.subr.mxu0 %v74
    %154 = vmatpush1.msra.mxu0 %v73
    %155 = vmatprep.subr.mxu0 %v72
    %156 = vmatpush1.msra.mxu0 %v71
    %157 = vmatprep.subr.mxu0 %v70
    %158 = vmatpush1.msra.mxu0 %v69
    %159 = vmatprep.subr.mxu0 %v68
    %160 = vmatpush1.msra.mxu0 %v67
    %161 = vmatprep.subr.mxu0 %v66
    %162 = vmatpush1.msra.mxu0 %v65
    %163 = vmatprep.subr.mxu0 %v64
    %164 = vmatpush1.msra.mxu0 %v63
    %165 = vmatprep.subr.mxu0 %v62
    %166 = vmatpush1.msra.mxu0 %v61
    %167 = vmatprep.subr.mxu0 %v60
    %168 = vmatpush1.msra.mxu0 %v59
    %169 = vmatprep.subr.mxu0 %v58
    %170 = vmatpush1.msra.mxu0 %v57
    %171 = vmatprep.subr.mxu0 %v56
    %172 = vmatpush1.msra.mxu0 %v55
    %173 = vmatprep.subr.mxu0 %v54
    %174 = vmatpush1.msra.mxu0 %v53
    %175 = vmatprep.subr.mxu0 %v116
    %176 = vmatpush2.msra.mxu0 %v115
    %177 = vmatprep.subr.mxu0 %v114
    %178 = vmatpush2.msra.mxu0 %v113
    %179 = vmatprep.subr.mxu0 %v112
    %180 = vmatpush2.msra.mxu0 %v111
    %181 = vmatprep.subr.mxu0 %v110
    %182 = vmatpush2.msra.mxu0 %v109
    %183 = vmatprep.subr.mxu0 %v108
    %184 = vmatpush2.msra.mxu0 %v107
    %185 = vmatprep.subr.mxu0 %v106
    %186 = vmatpush2.msra.mxu0 %v105
    %187 = vmatprep.subr.mxu0 %v104
    %188 = vmatpush2.msra.mxu0 %v103
    %189 = vmatprep.subr.mxu0 %v102
    %190 = vmatpush2.msra.mxu0 %v101
    %191 = vmatprep.subr.mxu0 %v100
    %192 = vmatpush2.msra.mxu0 %v99
    %193 = vmatprep.subr.mxu0 %v98
    %194 = vmatpush2.msra.mxu0 %v97
    %195 = vmatprep.subr.mxu0 %v96
    %196 = vmatpush2.msra.mxu0 %v95
    %197 = vmatprep.subr.mxu0 %v94
    %198 = vmatpush2.msra.mxu0 %v93
    %199 = vmatprep.subr.mxu0 %v92
    %200 = vmatpush2.msra.mxu0 %v91
    %201 = vmatprep.subr.mxu0 %v90
    %202 = vmatpush2.msra.mxu0 %v89
    %203 = vmatprep.subr.mxu0 %v88
    %204 = vmatpush2.msra.mxu0 %v87
    %205 = vmatprep.subr.mxu0 %v86
    %206 = vmatpush2.msra.mxu0 %v85
    %207 = vmatprep.mubr.f32.mxu0 %v140
    %208 = vmatmul.mubr.f32.gmra.mxu0 %v136
    %v209 = vpop.f32.mrf.mxu0
    %v210 = vadd.f32 0.0, %v209
    %v211 = vpop.f32.mrf.mxu0
    %v212 = vadd.f32 0.0, %v211
    %213 = vdwg.mxu0
    %v214 = vlaneseq
    %v215 = vshrl.u32 %v214, 7
    %v216 = vlaneseq
    %v217 = vand.u32 %v216, 127
    %v218 = vmul.u32 %v215, 128
    %v219 = vadd.s32 %v218, %v217
    %vm220 = vcmp.lt.s32.totalorder %v219, 128
    %s221 = sld [smem:[#allocation2]]
    %v222 = vmul.f32 %v131, %v210
    %v223 = vstv %s221
    %v224 = vadd.f32 %v222, %v223
    %v225 = vsel %vm220, %v224, 0.0
    %v226 = vmul.f32 %v225, %v225
    %v227 = vsel %vm118, %v226, 0.0
    %228 = vadd.xlane.f32.xlu0 %v227
    %v229 = vpop.xlane.xlu0 %228
    %v230 = vrot.slane %v229, 4
    %v231 = vadd.f32 %v229, %v230
    %v232 = vrot.slane %v231, 2
    %v233 = vadd.f32 %v231, %v232
    %v234 = vrot.slane %v233, 1
    %v235 = vadd.f32 %v233, %v234
    %s236 = vtos %v235
    %v237 = vstv %s236
    %v238 = vmax.f32 %v237, 1e-24
    %v239 = vrsqrt.pop %v238
    %v240 = vmul.f32 %v224, %v239
    %s241 = sld [smem:[#allocation2 + $0x1]]
    %v242 = vmul.f32 %v131, %v212
    %v243 = vstv %s241
    %v244 = vadd.f32 %v242, %v243
    %v245 = vsel %vm220, %v244, 0.0
    %v246 = vmul.f32 %v245, %v245
    %v247 = vsel %vm118, %v246, 0.0
    %248 = vadd.xlane.f32.xlu0 %v247
    %v249 = vpop.xlane.xlu0 %248
    %v250 = vrot.slane %v249, 4
    %v251 = vadd.f32 %v249, %v250
    %v252 = vrot.slane %v251, 2
    %v253 = vadd.f32 %v251, %v252
    %v254 = vrot.slane %v253, 1
    %v255 = vadd.f32 %v253, %v254
    %s256 = vtos %v255
    %v257 = vstv %s256
    %v258 = vmax.f32 %v257, 1e-24
    %v259 = vrsqrt.pop %v258
    %v260 = vmul.f32 %v244, %v259
    %v261 = vadd.f32 %v240, %v260
    %262 = vst [vmem:[#allocation9] sm:$0x1] %v261
    // Predicated region
    $region26: #{tpu_custom_call.1} parent=1 // pred_check
      _
    $region27: #{tpu_custom_call.1} parent=1 // pred_check_branch
      %264 = sbr.rel (0) target = $region29
    $region28: #{tpu_custom_call.1} parent=1 // pred_region
      %s266 = ssub.s32 16, 16
      %267 = vsyncadd [#allocation4], %s266
      %s269 = sshll.u32 [#allocation9], 4
      %s270 = int_to_ptr.vmem [resolvable:$true] %s269
      %272 = dma.vmem_to_hbm [thread:$0]  %s270, 16, %s3, [#allocation4]
    $region29: #{tpu_custom_call.1} parent=1 // pred_fallthru
      _
    // Predicated region
    $region30: #{tpu_custom_call.1} parent=1 // pred_check
      _
    $region31: #{tpu_custom_call.1} parent=1 // pred_check_branch
      %274 = sbr.rel (0) target = $region33
    $region32: #{tpu_custom_call.1} parent=1 // pred_region
      %275 = dma.done [#allocation4], 16
    $region33: #{tpu_custom_call.1} parent=1 // pred_fallthru
      _
    %276 = vsyncpa [#allocation3], 1
    %277 = vsyncpa [#allocation8], 1
    %278 = vsyncpa [#allocation4], 1
    %279 = vsyncpa [#allocation5], 1

</llo_original>
